<compile_context>
chip_gen: v7x
topology: tpu7x:2x2x1
jax: 0.10.0
libtpu: 0.0.40
codegen_flags: <defaults>
</compile_context>

<pallas_src>
import functools

import jax
import jax.numpy as jnp
from jax.experimental import pallas as pl
from jax.experimental.pallas import tpu as pltpu


def _round_up(x, m):
    return (x + m - 1) // m * m


def _head_recurrence_kernel(num_steps, x_ref, wew_ref, w2_ref, params_ref,
                            out_ref, ctx_ref):
    """Whole sequence of the ContextCTRNN recurrence for one head."""
    h = pl.program_id(0)
    alpha = params_ref[3 * h + 0]
    beta_mult = params_ref[3 * h + 1]
    beta_power = params_ref[3 * h + 2]

    T, Bp, _ = x_ref.shape
    V, two_c = wew_ref.shape
    C = two_c // 2
    C2, _ = w2_ref.shape                       # C*C, Vp

    wew = wew_ref[...]                         # (V, 2C) bf16, resident per head
    w2 = w2_ref[...]                           # (C*C, Vp) bf16, resident per head

    vocab_ids = jax.lax.broadcasted_iota(jnp.int32, (Bp, V), 1)

    # fresh context at the start of every head's sequence
    ctx_ref[...] = jnp.zeros_like(ctx_ref)

    @pl.loop(0, T)
    def _(t):
        tok = x_ref[t]                                       # (Bp, 1) int32
        # TODO(synk): for production vocab sizes replace the one-hot matmul
        # lookup with a scalar-prefetch / DMA gather of the needed rows.
        onehot = (tok == vocab_ids).astype(wew.dtype)        # (Bp, V)

        # fused embedding lookup: one MXU matmul for both tables
        emb = jnp.dot(onehot, wew, preferred_element_type=jnp.float32)  # (Bp, 2C)
        ctx_emb = emb[:, :C]
        act_emb = emb[:, C:]
        emb_norm = jnp.sqrt(jnp.sum(ctx_emb * ctx_emb, axis=1, keepdims=True))

        # context EMA update, repeated num_steps times (elementwise math in f32)
        ctx = ctx_ref[...]
        for _ in range(num_steps):
            ctx_norm = jnp.sqrt(jnp.sum(ctx * ctx, axis=1, keepdims=True))
            ratio = emb_norm * pl.reciprocal(emb_norm + ctx_norm, approx=True)
            beta = jnp.clip(alpha * (beta_mult * ratio) ** beta_power, 0.0, 1.0)
            ctx = (1.0 - beta) * ctx + beta * ctx_emb
        ctx_ref[...] = ctx

        # Action computation hoisted out of the num_steps loop: in the reference
        # module the output is overwritten every inner step, so only the final
        # context matters.  bmm(action_map, act_emb) is reformulated as one MXU
        # matmul (B, C*C) @ (C*C, Vp) with a lane-dense (Bp, Vp) output.
        m = (act_emb[:, :, None] * ctx[:, None, :]).reshape(Bp, C2)
        out_ref[t] = jnp.dot(m.astype(w2.dtype), w2,
                             preferred_element_type=jnp.float32)     # (Bp, Vp)


def _mix_ce_kernel(V, raw_ref, tgt_ref, logits_ref, loss_ref):
    """Softmax over heads + sum, and per-sample cross-entropy for Tb timesteps."""
    raw = raw_ref[...]                                   # (H, Tb, Bp, Vp) f32
    _, Tb, Bp, Vp = raw.shape

    # faithful to the reference: softmax over the *head* axis, then sum heads
    m = jnp.max(raw, axis=0, keepdims=True)
    e = jnp.exp(raw - m)
    s = jnp.sum(e, axis=0, keepdims=True)
    logits = jnp.sum(e / s, axis=0)                      # (Tb, Bp, Vp)
    logits_ref[...] = logits

    # cross-entropy over the real vocab only (padded lanes masked out)
    vocab_ids = jax.lax.broadcasted_iota(jnp.int32, (Tb, Bp, Vp), 2)
    valid = vocab_ids < V
    masked = jnp.where(valid, logits, jnp.float32(-1e30))
    lmax = jnp.max(masked, axis=2, keepdims=True)
    ex = jnp.where(valid, jnp.exp(logits - lmax), 0.0)
    lse = jnp.log(jnp.sum(ex, axis=2, keepdims=True)) + lmax

    tgt = tgt_ref[...]                                   # (Tb, Bp, 1) int32
    onehot = (tgt == vocab_ids).astype(jnp.float32)
    loss_ref[...] = -jnp.sum(onehot * (logits - lse), axis=2, keepdims=True)


def _pick_tb(T, H, Bp, Vp, budget_bytes=4 << 20):
    tb = T
    while tb > 1 and (H * tb * Bp * Vp * 4 > budget_bytes or T % tb != 0):
        tb -= 1
    return tb


def context_heads_forward(x_tokens, targets, params, num_steps=1):
    """x_tokens: (T, B) int32, targets: (B, T) int32. Returns (logits (T,B,V), loss)."""
    we = params["emb2ctx"]        # (H, V, C)
    wa = params["emb2act"]        # (H, V, C)
    wm = params["ctx2act"]        # (H, V*C, C)  -- PyTorch Linear weight layout
    scalars = params["scalars"]   # (H, 3)

    H, V, C = we.shape
    T, B = x_tokens.shape
    Bp = _round_up(B, 8)          # sublane-pad batch
    Vp = _round_up(V, 128)        # lane-pad vocab (lane-dense stores / CE)

    # fused embedding table (bf16 halves DMA bytes & VMEM; MXU accumulates f32)
    wew = jnp.concatenate([we, wa], axis=2).astype(jnp.bfloat16)          # (H, V, 2C)

    # W2[h, c*C + c', v] = wm[h, v*C + c, c']  -> out = (act⊗ctx) @ W2
    w2 = jnp.transpose(wm.reshape(H, V, C, C), (0, 2, 3, 1)).reshape(H, C * C, V)
    w2 = jnp.pad(w2, ((0, 0), (0, 0), (0, Vp - V))).astype(jnp.bfloat16)  # (H, C*C, Vp)

    scalars_flat = scalars.reshape(-1).astype(jnp.float32)                # (H*3,) SMEM

    x3 = jnp.pad(x_tokens.astype(jnp.int32), ((0, 0), (0, Bp - B))).reshape(T, Bp, 1)
    tgt3 = jnp.pad(jnp.transpose(targets, (1, 0)).astype(jnp.int32),
                   ((0, 0), (0, Bp - B))).reshape(T, Bp, 1)

    # Kernel 1: per-head recurrence over the whole sequence.
    # NOTE(v7x): at large V*C^2, consider pipeline_mode=pl.Buffered(1) on the
    # weight specs and an explicit vmem_limit_bytes (64 MiB physical VMEM).
    raw = pl.pallas_call(
        functools.partial(_head_recurrence_kernel, num_steps),
        out_shape=jax.ShapeDtypeStruct((H, T, Bp, Vp), jnp.float32),
        grid=(H,),
        in_specs=[
            pl.BlockSpec((T, Bp, 1), lambda h: (0, 0, 0)),          # all tokens
            pl.BlockSpec((None, V, 2 * C), lambda h: (h, 0, 0)),    # [emb2ctx|emb2act][h]
            pl.BlockSpec((None, C * C, Vp), lambda h: (h, 0, 0)),   # W2[h]
            pl.BlockSpec(memory_space=pltpu.MemorySpace.SMEM),      # scalars
        ],
        out_specs=pl.BlockSpec((None, T, Bp, Vp), lambda h: (h, 0, 0, 0)),
        scratch_shapes=[pltpu.VMEM((Bp, C), jnp.float32)],          # carried context
        compiler_params=pltpu.CompilerParams(
            dimension_semantics=("parallel",)),                     # heads -> 2nd TC on v7x
    )(x3, wew, w2, scalars_flat)

    # Kernel 2: head mix + cross-entropy, Tb timesteps per grid step.
    Tb = _pick_tb(T, H, Bp, Vp)
    logits_p, per_loss = pl.pallas_call(
        functools.partial(_mix_ce_kernel, V),
        out_shape=(jax.ShapeDtypeStruct((T, Bp, Vp), jnp.float32),
                   jax.ShapeDtypeStruct((T, Bp, 1), jnp.float32)),
        grid=(T // Tb,),
        in_specs=[
            pl.BlockSpec((H, Tb, Bp, Vp), lambda t: (0, t, 0, 0)),
            pl.BlockSpec((Tb, Bp, 1), lambda t: (t, 0, 0)),
        ],
        out_specs=(pl.BlockSpec((Tb, Bp, Vp), lambda t: (t, 0, 0)),
                   pl.BlockSpec((Tb, Bp, 1), lambda t: (t, 0, 0))),
        compiler_params=pltpu.CompilerParams(
            dimension_semantics=("parallel",)),
    )(raw, tgt3)

    logits = logits_p[:, :B, :V]                    # drop batch / vocab padding
    loss = jnp.mean(per_loss[:, :B, 0])             # F.cross_entropy 'mean' over B*T
    return logits, loss


def init_params(key, context_size, vocab_size, num_heads):
    C, V, H = context_size, vocab_size, num_heads
    k1, k2, k3 = jax.random.split(key, 3)
    emb2ctx = jax.random.normal(k1, (H, V, C), jnp.float32)   # nn.Embedding ~ N(0,1)
    emb2act = jax.random.normal(k2, (H, V, C), jnp.float32)
    bound = 1.0 / (C ** 0.5)
    ctx2act = jax.random.uniform(k3, (H, V * C, C), jnp.float32, -bound, bound)
    # alpha (dt=None -> 1.0), beta_mult=1.0, beta_power=1.0 per head
    scalars = jnp.tile(jnp.array([[1.0, 1.0, 1.0]], jnp.float32), (H, 1))
    # TODO(synk): context2context_map is defined in __init__ but unused in forward; omitted.
    return dict(emb2ctx=emb2ctx, emb2act=emb2act, ctx2act=ctx2act, scalars=scalars)


if __name__ == "__main__":
    context_size, vocab_size, num_heads = 16, 32, 3
    T, B = 8, 4

    key = jax.random.PRNGKey(0)
    kp, kx, kt = jax.random.split(key, 3)
    params = init_params(kp, context_size, vocab_size, num_heads)
    x = jax.random.randint(kx, (T, B), 0, vocab_size, jnp.int32)          # token ids
    targets = jax.random.randint(kt, (B, T), 0, vocab_size, jnp.int32)    # class ids

    logits, loss = context_heads_forward(x, targets, params, num_steps=1)
    jax.block_until_ready((logits, loss))

    assert logits.shape == (T, B, vocab_size)
    assert loss.shape == ()
    print("KERNEL_OK")
</pallas_src>

<mosaic_0001>
module attributes {stable_mosaic.version = 11 : i64} {
  func.func @_head_recurrence_kernel(%arg0: i32, %arg1: memref<8x8x1xi32, #tpu.memory_space<vmem>>, %arg2: memref<1x32x32xbf16, #tpu.memory_space<vmem>>, %arg3: memref<1x256x128xbf16, #tpu.memory_space<vmem>>, %arg4: memref<9xf32, #tpu.memory_space<smem>>, %arg5: memref<1x8x8x128xf32, #tpu.memory_space<vmem>>, %arg6: memref<8x16xf32, #tpu.memory_space<vmem>>) attributes {dimension_semantics = [#tpu.dimension_semantics<parallel>], iteration_bounds = array<i64: 3>, scalar_prefetch = 0 : i64, scratch_operands = 1 : i64, tpu.core_type = #tpu.core_type<tc>, window_params = [{pipeline_mode = #tpu.pipeline_mode<synchronous>, transform_indices = @transform_0, window_bounds = array<i64: 8, 8, 1>}, {transform_indices = @transform_1, window_bounds = array<i64: 1, 32, 32>}, {transform_indices = @transform_2, window_bounds = array<i64: 1, 256, 128>}, {transform_indices = @transform_3, window_bounds = array<i64: 9>}, {transform_indices = @transform_4, window_bounds = array<i64: 1, 8, 8, 128>}]} {
    %c3_i32 = arith.constant 3 : i32
    %0 = arith.muli %c3_i32, %arg0 : i32
    %c0_i32 = arith.constant 0 : i32
    %1 = arith.addi %0, %c0_i32 : i32
    %2 = arith.index_cast %1 : i32 to index
    %3 = memref.load %arg4[%2] : memref<9xf32, #tpu.memory_space<smem>>
    %c3_i32_0 = arith.constant 3 : i32
    %4 = arith.muli %c3_i32_0, %arg0 : i32
    %c1_i32 = arith.constant 1 : i32
    %5 = arith.addi %4, %c1_i32 : i32
    %6 = arith.index_cast %5 : i32 to index
    %7 = memref.load %arg4[%6] : memref<9xf32, #tpu.memory_space<smem>>
    %c3_i32_1 = arith.constant 3 : i32
    %8 = arith.muli %c3_i32_1, %arg0 : i32
    %c2_i32 = arith.constant 2 : i32
    %9 = arith.addi %8, %c2_i32 : i32
    %10 = arith.index_cast %9 : i32 to index
    %11 = memref.load %arg4[%10] : memref<9xf32, #tpu.memory_space<smem>>
    %c0 = arith.constant 0 : index
    %c0_2 = arith.constant 0 : index
    %c0_3 = arith.constant 0 : index
    %12 = vector.load %arg2[%c0, %c0_2, %c0_3] : memref<1x32x32xbf16, #tpu.memory_space<vmem>>, vector<1x32x32xbf16>
    %13 = vector.shape_cast %12 : vector<1x32x32xbf16> to vector<32x32xbf16>
    %c0_4 = arith.constant 0 : index
    %c0_5 = arith.constant 0 : index
    %c0_6 = arith.constant 0 : index
    %14 = vector.load %arg3[%c0_4, %c0_5, %c0_6] : memref<1x256x128xbf16, #tpu.memory_space<vmem>>, vector<1x256x128xbf16>
    %15 = vector.shape_cast %14 : vector<1x256x128xbf16> to vector<256x128xbf16>
    %16 = tpu.iota {dimensions = array<i32: 1>} : vector<8x32xi32>
    %cst = arith.constant 0.000000e+00 : f32
    %17 = vector.broadcast %cst : f32 to vector<8x16xf32>
    %c0_7 = arith.constant 0 : index
    %c0_8 = arith.constant 0 : index
    %18 = vector.load %arg6[%c0_7, %c0_8] : memref<8x16xf32, #tpu.memory_space<vmem>>, vector<8x16xf32>
    tpu.vector_store %arg6[%c0_7, %c0_8], %17 {strides = array<i32>} : memref<8x16xf32, #tpu.memory_space<vmem>>, vector<8x16xf32>,
    %c0_i32_9 = arith.constant 0 : i32
    %c8_i32 = arith.constant 8 : i32
    %19 = arith.addi %c0_i32_9, %c8_i32 : i32
    %c1_i32_10 = arith.constant 1 : i32
    scf.for %arg7 = %c0_i32_9 to %19 step %c1_i32_10  : i32 {
      %c1_i32_12 = arith.constant 1 : i32
      %20 = arith.muli %arg7, %c1_i32_12 : i32
      %c0_i32_13 = arith.constant 0 : i32
      %21 = arith.addi %c0_i32_13, %20 : i32
      %22 = arith.index_cast %21 : i32 to index
      %c0_14 = arith.constant 0 : index
      %c0_15 = arith.constant 0 : index
      %23 = vector.load %arg1[%22, %c0_14, %c0_15] : memref<8x8x1xi32, #tpu.memory_space<vmem>>, vector<1x8x1xi32>
      %24 = vector.shape_cast %23 : vector<1x8x1xi32> to vector<8x1xi32>
      %25 = vector.broadcast %24 : vector<8x1xi32> to vector<8x32xi32>
      %26 = arith.cmpi eq, %25, %16 : vector<8x32xi32>
      %27 = arith.extui %26 : vector<8x32xi1> to vector<8x32xi32>
      %28 = arith.sitofp %27 : vector<8x32xi32> to vector<8x32xf32>
      %29 = arith.truncf %28 : vector<8x32xf32> to vector<8x32xbf16>
      %cst_16 = arith.constant dense<0.000000e+00> : vector<8x32xf32>
      %30 = tpu.matmul %29, %13, %cst_16 {dimension_numbers = #tpu.dot_dimension_numbers<[1], [0], [0], [1], [0, 0, 1, 1], [], []>} : vector<8x32xbf16>, vector<32x32xbf16>, vector<8x32xf32> -> vector<8x32xf32>
      %31 = vector.extract_strided_slice %30 {offsets = [0, 0], sizes = [8, 16], strides = [1, 1]} : vector<8x32xf32> to vector<8x16xf32>
      %32 = vector.extract_strided_slice %30 {offsets = [0, 16], sizes = [8, 16], strides = [1, 1]} : vector<8x32xf32> to vector<8x16xf32>
      %33 = arith.mulf %31, %31 : vector<8x16xf32>
      %cst_17 = arith.constant dense<0.000000e+00> : vector<8xf32>
      %34 = vector.multi_reduction <add>, %33, %cst_17 [1] : vector<8x16xf32> to vector<8xf32>
      %35 = vector.shape_cast %34 : vector<8xf32> to vector<8x1xf32>
      %36 = math.sqrt %35 : vector<8x1xf32>
      %c0_18 = arith.constant 0 : index
      %c0_19 = arith.constant 0 : index
      %37 = vector.load %arg6[%c0_18, %c0_19] : memref<8x16xf32, #tpu.memory_space<vmem>>, vector<8x16xf32>
      %38 = arith.mulf %37, %37 : vector<8x16xf32>
      %cst_20 = arith.constant dense<0.000000e+00> : vector<8xf32>
      %39 = vector.multi_reduction <add>, %38, %cst_20 [1] : vector<8x16xf32> to vector<8xf32>
      %40 = vector.shape_cast %39 : vector<8xf32> to vector<8x1xf32>
      %41 = math.sqrt %40 : vector<8x1xf32>
      %42 = arith.addf %36, %41 : vector<8x1xf32>
      %43 = tpu.reciprocal %42 {approx = true} : vector<8x1xf32> -> vector<8x1xf32>
      %44 = arith.mulf %36, %43 : vector<8x1xf32>
      %45 = vector.broadcast %7 : f32 to vector<8x1xf32>
      %46 = arith.mulf %45, %44 : vector<8x1xf32>
      %47 = vector.broadcast %11 : f32 to vector<8x1xf32>
      %48 = math.powf %46, %47 : vector<8x1xf32>
      %49 = vector.broadcast %3 : f32 to vector<8x1xf32>
      %50 = arith.mulf %49, %48 : vector<8x1xf32>
      %cst_21 = arith.constant 0.000000e+00 : f32
      %cst_22 = arith.constant 1.000000e+00 : f32
      %51 = vector.broadcast %cst_21 : f32 to vector<8x1xf32>
      %52 = arith.maximumf %51, %50 : vector<8x1xf32>
      %53 = vector.broadcast %cst_22 : f32 to vector<8x1xf32>
      %54 = arith.minimumf %53, %52 : vector<8x1xf32>
      %cst_23 = arith.constant 1.000000e+00 : f32
      %55 = vector.broadcast %cst_23 : f32 to vector<8x1xf32>
      %56 = arith.subf %55, %54 : vector<8x1xf32>
      %57 = vector.broadcast %56 : vector<8x1xf32> to vector<8x16xf32>
      %58 = arith.mulf %57, %37 : vector<8x16xf32>
      %59 = vector.broadcast %54 : vector<8x1xf32> to vector<8x16xf32>
      %60 = arith.mulf %59, %31 : vector<8x16xf32>
      %61 = arith.addf %58, %60 : vector<8x16xf32>
      %c0_24 = arith.constant 0 : index
      %c0_25 = arith.constant 0 : index
      %62 = vector.load %arg6[%c0_24, %c0_25] : memref<8x16xf32, #tpu.memory_space<vmem>>, vector<8x16xf32>
      tpu.vector_store %arg6[%c0_24, %c0_25], %61 {strides = array<i32>} : memref<8x16xf32, #tpu.memory_space<vmem>>, vector<8x16xf32>,
      %63 = vector.shape_cast %32 : vector<8x16xf32> to vector<8x16x1xf32>
      %64 = vector.shape_cast %61 : vector<8x16xf32> to vector<8x1x16xf32>
      %65 = vector.broadcast %63 : vector<8x16x1xf32> to vector<8x16x16xf32>
      %66 = vector.broadcast %64 : vector<8x1x16xf32> to vector<8x16x16xf32>
      %67 = arith.mulf %65, %66 : vector<8x16x16xf32>
      %68 = vector.shape_cast %67 : vector<8x16x16xf32> to vector<8x256xf32>
      %69 = arith.truncf %68 : vector<8x256xf32> to vector<8x256xbf16>
      %cst_26 = arith.constant dense<0.000000e+00> : vector<8x128xf32>
      %70 = tpu.matmul %69, %15, %cst_26 {dimension_numbers = #tpu.dot_dimension_numbers<[1], [0], [0], [1], [0, 0, 1, 1], [], []>} : vector<8x256xbf16>, vector<256x128xbf16>, vector<8x128xf32> -> vector<8x128xf32>
      %c0_27 = arith.constant 0 : index
      %71 = arith.index_cast %21 : i32 to index
      %c0_28 = arith.constant 0 : index
      %c0_29 = arith.constant 0 : index
      %72 = vector.load %arg5[%c0_27, %71, %c0_28, %c0_29] : memref<1x8x8x128xf32, #tpu.memory_space<vmem>>, vector<1x1x8x128xf32>
      %73 = vector.shape_cast %72 : vector<1x1x8x128xf32> to vector<8x128xf32>
      %74 = vector.shape_cast %70 : vector<8x128xf32> to vector<1x1x8x128xf32>
      tpu.vector_store %arg5[%c0_27, %71, %c0_28, %c0_29], %74 {strides = array<i32>} : memref<1x8x8x128xf32, #tpu.memory_space<vmem>>, vector<1x1x8x128xf32>,
    }
    %c8_i32_11 = arith.constant 8 : i32
    return
  }
  func.func @transform_0(%arg0: i32) -> (i32, i32, i32) {
    %c0_i32 = arith.constant 0 : i32
    %c0_i32_0 = arith.constant 0 : i32
    %c0_i32_1 = arith.constant 0 : i32
    %c0_i32_2 = arith.constant 0 : i32
    return %c0_i32, %c0_i32_0, %c0_i32_1 : i32, i32, i32
  }
  func.func @transform_1(%arg0: i32) -> (i32, i32, i32) {
    %c0_i32 = arith.constant 0 : i32
    %c0_i32_0 = arith.constant 0 : i32
    %c0_i32_1 = arith.constant 0 : i32
    return %arg0, %c0_i32, %c0_i32_0 : i32, i32, i32
  }
  func.func @transform_2(%arg0: i32) -> (i32, i32, i32) {
    %c0_i32 = arith.constant 0 : i32
    %c0_i32_0 = arith.constant 0 : i32
    %c0_i32_1 = arith.constant 0 : i32
    return %arg0, %c0_i32, %c0_i32_0 : i32, i32, i32
  }
  func.func @transform_3(%arg0: i32) -> i32 {
    %c0_i32 = arith.constant 0 : i32
    %c0_i32_0 = arith.constant 0 : i32
    return %c0_i32 : i32
  }
  func.func @transform_4(%arg0: i32) -> (i32, i32, i32, i32) {
    %c0_i32 = arith.constant 0 : i32
    %c0_i32_0 = arith.constant 0 : i32
    %c0_i32_1 = arith.constant 0 : i32
    %c0_i32_2 = arith.constant 0 : i32
    return %arg0, %c0_i32, %c0_i32_0, %c0_i32_1 : i32, i32, i32, i32
  }
}

</mosaic_0001>

<llo_original>
// kernel: tpu_custom_call.1
$region0: #{tpu_custom_call.1}
  #allocation0 [shape = 'u32[]', space=smem, size = 0x4, offset = 0x4, fixed_abs, tag = 'smem constant byte address 0x4 - core index']
  #allocation1 [shape = 'u32[144,128]{1,0:T(1,128)}', space=vmem, size = 0x12000, scoped, tag = 'internal scratch']
  #allocation2 [shape = 'f32[8,16]{1,0:T(8,128)}', space=vmem, size = 0x1000, scoped, tag = 'scratch operand']
  %s0 = inlined_call_operand.vmem [shape: s32[8,8,1], index: 0, kind: input, shape index: {}]
  %s1 = inlined_call_operand.vmem [shape: bf16[3,32,32], index: 1, kind: input, shape index: {}]
  %s2 = inlined_call_operand.hbm [shape: bf16[3,256,128], index: 2, kind: input, shape index: {}]
  %s3 = inlined_call_operand.vmem [shape: f32[9], index: 3, kind: input, shape index: {}]
  %s4 = inlined_call_operand.hbm [shape: f32[3,8,8,128], index: 4, kind: output, shape index: {}]
  %s5 = sld [smem:[#allocation0]]
  $region64: #{tpu_custom_call.1} parent=0
    _
  %s7 = ssub.s32 1, %s5
  %s8 = scalar_select 0, %s7, %s5
  $region1: #{tpu_custom_call.1} parent=0
    #allocation3 [shape = 'u8[131072]{0}', space=vmem, size = 0x20000, scoped, tag = 'input window, operand 2']
    #allocation4 [shape = 's32[2]{0}', space=sflag, size = 0x8, scoped, tag = 'scoped memory for tpu_custom_call.1']
    #allocation5 [shape = 's32[2]{0}', space=sflag, size = 0x8, scoped, tag = 'scoped memory for tpu_custom_call.1']
    #allocation6 [shape = 's32[2]{0}', space=sflag, size = 0x8, scoped, tag = 'scoped memory for tpu_custom_call.1']
    #allocation7 [shape = 'u8[512]{0}', space=smem, size = 0x200, scoped, tag = 'input window, operand 3, single buffered']
    #allocation8 [shape = 'u8[65536]{0}', space=vmem, size = 0x10000, scoped, tag = 'output window, operand 0']
    %9 = vsyncpa [#allocation4], 0
    %s10 = scalar_lea.sflag [#allocation4], 1
    %11 = vsyncpa %s10, 0
    %12 = vsyncpa [#allocation6], 0
    %13 = vsyncpa [#allocation5], 0
    %s14 = scalar_lea.sflag [#allocation5], 1
    %15 = vsyncpa %s14, 0
    loop: start=0, step=1, limit=5
    $region2: #{tpu_custom_call.1} parent=1 // loop_pre_header
      _
    $region3: #{tpu_custom_call.1} parent=1 // loop_header
      %s17 = sphi 0, %s21
      %p18 = scmp.ge.s32.totalorder %s17, 5
      %s25 = sphi 0, %s25
      %s27 = sphi 0, %s25
      %s28 = sphi 0, %s27
      %s42 = sphi 0, %s28
      %s48 = sphi 0, %s50
      %s51 = sphi 0, %s48
      %s52 = sphi 0, %s51
      %s68 = sphi 0, %s52
      %s74 = sphi 0, %s76
      %s77 = sphi 0, %s74
      %s78 = sphi 0, %s77
      %s94 = sphi 0, %s78
      %s98 = sphi 0, %s98
      %s100 = sphi 0, %s98
      %s101 = sphi 0, %s100
      %s115 = sphi 0, %s101
      %s121 = sphi 0, %s123
      %s124 = sphi 0, %s121
      %s125 = sphi 0, %s124
      %s141 = sphi 0, %s125
    $region4: #{tpu_custom_call.1} parent=1 // loop_header_branch
      %20 = sbr.rel (%p18) target = $region8
    $region5: #{tpu_custom_call.1} parent=1 // loop_body
      %s22 = ssub.s32 %s17, 1
      %s23 = ssub.s32 %s17, 2
      %s24 = sadd.s32 %s17, 1
      %s26 = sadd.s32 %s25, 1
      %p29 = scmp.eq.s32.totalorder %s17, 2
      %p30 = scmp.ne.s32.totalorder %s25, %s27
      %p31 = scmp.eq.s32.totalorder %s17, 0
      %p32 = por %p30, %p31
      %p33 = scmp.ne.s32.totalorder %s25, %s27
      %p34 = scmp.eq.s32.totalorder %s22, 2
      %p35 = por %p33, %p34
      %p36 = scmp.ne.s32.totalorder %s27, %s28
      %p37 = scmp.eq.s32.totalorder %s22, 0
      %p38 = por %p36, %p37
      %p39 = scmp.ne.s32.totalorder %s27, %s28
      %p40 = scmp.eq.s32.totalorder %s23, 2
      %p41 = por %p39, %p40
      %p43 = scmp.ne.s32.totalorder %s28, %s42
      %p44 = scmp.eq.s32.totalorder %s23, 0
      %p45 = por %p43, %p44
      %s46 = ssub.s32 %s17, %s24
      %p47 = scmp.eq.s32.totalorder %s46, 0
      %s49 = sadd.s32 %s48, 1
      %s50 = scalar_select %p47, %s48, %s49
      %p53 = pneg %p47
      %p54 = scmp.eq.s32.totalorder %s17, 2
      %p55 = por %p53, %p54
      %p56 = scmp.ne.s32.totalorder %s48, %s51
      %p57 = scmp.eq.s32.totalorder %s17, 0
      %p58 = por %p56, %p57
      %p59 = scmp.ne.s32.totalorder %s48, %s51
      %p60 = scmp.eq.s32.totalorder %s22, 2
      %p61 = por %p59, %p60
      %p62 = scmp.ne.s32.totalorder %s51, %s52
      %p63 = scmp.eq.s32.totalorder %s22, 0
      %p64 = por %p62, %p63
      %p65 = scmp.ne.s32.totalorder %s51, %s52
      %p66 = scmp.eq.s32.totalorder %s23, 2
      %p67 = por %p65, %p66
      %p69 = scmp.ne.s32.totalorder %s52, %s68
      %p70 = scmp.eq.s32.totalorder %s23, 0
      %p71 = por %p69, %p70
      %s72 = ssub.s32 %s17, %s24
      %p73 = scmp.eq.s32.totalorder %s72, 0
      %s75 = sadd.s32 %s74, 1
      %s76 = scalar_select %p73, %s74, %s75
      %p79 = pneg %p73
      %p80 = scmp.eq.s32.totalorder %s17, 2
      %p81 = por %p79, %p80
      %p82 = scmp.ne.s32.totalorder %s74, %s77
      %p83 = scmp.eq.s32.totalorder %s17, 0
      %p84 = por %p82, %p83
      %p85 = scmp.ne.s32.totalorder %s74, %s77
      %p86 = scmp.eq.s32.totalorder %s22, 2
      %p87 = por %p85, %p86
      %p88 = scmp.ne.s32.totalorder %s77, %s78
      %p89 = scmp.eq.s32.totalorder %s22, 0
      %p90 = por %p88, %p89
      %p91 = scmp.ne.s32.totalorder %s77, %s78
      %p92 = scmp.eq.s32.totalorder %s23, 2
      %p93 = por %p91, %p92
      %p95 = scmp.ne.s32.totalorder %s78, %s94
      %p96 = scmp.eq.s32.totalorder %s23, 0
      %p97 = por %p95, %p96
      %s99 = sadd.s32 %s98, 1
      %p102 = scmp.eq.s32.totalorder %s17, 2
      %p103 = scmp.ne.s32.totalorder %s98, %s100
      %p104 = scmp.eq.s32.totalorder %s17, 0
      %p105 = por %p103, %p104
      %p106 = scmp.ne.s32.totalorder %s98, %s100
      %p107 = scmp.eq.s32.totalorder %s22, 2
      %p108 = por %p106, %p107
      %p109 = scmp.ne.s32.totalorder %s100, %s101
      %p110 = scmp.eq.s32.totalorder %s22, 0
      %p111 = por %p109, %p110
      %p112 = scmp.ne.s32.totalorder %s100, %s101
      %p113 = scmp.eq.s32.totalorder %s23, 2
      %p114 = por %p112, %p113
      %p116 = scmp.ne.s32.totalorder %s101, %s115
      %p117 = scmp.eq.s32.totalorder %s23, 0
      %p118 = por %p116, %p117
      %s119 = ssub.s32 %s17, %s24
      %p120 = scmp.eq.s32.totalorder %s119, 0
      %s122 = sadd.s32 %s121, 1
      %s123 = scalar_select %p120, %s121, %s122
      %p126 = pneg %p120
      %p127 = scmp.eq.s32.totalorder %s17, 2
      %p128 = por %p126, %p127
      %p129 = scmp.ne.s32.totalorder %s121, %s124
      %p130 = scmp.eq.s32.totalorder %s17, 0
      %p131 = por %p129, %p130
      %p132 = scmp.ne.s32.totalorder %s121, %s124
      %p133 = scmp.eq.s32.totalorder %s22, 2
      %p134 = por %p132, %p133
      %p135 = scmp.ne.s32.totalorder %s124, %s125
      %p136 = scmp.eq.s32.totalorder %s22, 0
      %p137 = por %p135, %p136
      %p138 = scmp.ne.s32.totalorder %s124, %s125
      %p139 = scmp.eq.s32.totalorder %s23, 2
      %p140 = por %p138, %p139
      %p142 = scmp.ne.s32.totalorder %s125, %s141
      %p143 = scmp.eq.s32.totalorder %s23, 0
      %p144 = por %p142, %p143
      %p145 = scmp.le.s32.totalorder 1, %s17
      %p146 = scmp.lt.s32.totalorder %s17, 4
      %p147 = pnand %p145, %p146
      %p148 = pneg %p147
      // Predicated region
      $region9: #{tpu_custom_call.1} parent=5 // pred_check
        _
      $region10: #{tpu_custom_call.1} parent=5 // pred_check_branch
        %150 = sbr.rel (%p147) target = $region12
      $region11: #{tpu_custom_call.1} parent=5 // pred_region
        %s151 = ssub.s32 %s17, 1
        // Predicated region
        $region13: #{tpu_custom_call.1} parent=11 // pred_check
          %p152 = pneg %p38
        $region14: #{tpu_custom_call.1} parent=11 // pred_check_branch
          %154 = sbr.rel (%p152) target = $region16
        $region15: #{tpu_custom_call.1} parent=11 // pred_region
          _
        $region16: #{tpu_custom_call.1} parent=11 // pred_fallthru
          _
        // Predicated region
        $region17: #{tpu_custom_call.1} parent=11 // pred_check
          %p155 = pneg %p111
        $region18: #{tpu_custom_call.1} parent=11 // pred_check_branch
          %157 = sbr.rel (%p155) target = $region20
        $region19: #{tpu_custom_call.1} parent=11 // pred_region
          %s159 = ssub.s32 16, 16
          %160 = vsyncadd [#allocation6], %s159
          %s162 = sshll.u32 %s3, 4
          %s163 = int_to_ptr.vmem [resolvable:$true] %s162
          %165 = dma.vmem_to_smem %s163, 16, [#allocation7], [#allocation6]
        $region20: #{tpu_custom_call.1} parent=11 // pred_fallthru
          _
      $region12: #{tpu_custom_call.1} parent=5 // pred_fallthru
        _
      %p166 = scmp.lt.s32.totalorder %s17, 3
      // Predicated region
      $region21: #{tpu_custom_call.1} parent=5 // pred_check
        %p167 = pneg %p166
      $region22: #{tpu_custom_call.1} parent=5 // pred_check_branch
        %169 = sbr.rel (%p167) target = $region24
      $region23: #{tpu_custom_call.1} parent=5 // pred_region
        // Predicated region
        $region25: #{tpu_custom_call.1} parent=23 // pred_check
          %p170 = pneg %p58
        $region26: #{tpu_custom_call.1} parent=23 // pred_check_branch
          %172 = sbr.rel (%p170) target = $region28
        $region27: #{tpu_custom_call.1} parent=23 // pred_region
          %p173 = scmp.lt.s32.totalorder %s17, 2
          %s174 = scalar_select %p173, %s17, 2
          %s175 = smul.addr %s174, 4
          %s176 = smul.addr %s175, 4
          %s177 = scalar_lea.vmem %s1, %s176
        $region28: #{tpu_custom_call.1} parent=23 // pred_fallthru
          _
        // Predicated region
        $region29: #{tpu_custom_call.1} parent=23 // pred_check
          %p178 = pneg %p84
        $region30: #{tpu_custom_call.1} parent=23 // pred_check_branch
          %180 = sbr.rel (%p178) target = $region32
        $region31: #{tpu_custom_call.1} parent=23 // pred_region
          %s181 = sand.u32 %s74, 1
          %s182 = scalar_lea.sflag [#allocation4], %s181
          %s183 = sand.u32 %s74, 1
          %s184 = smul.addr %s183, 128
          %s185 = scalar_lea.vmem [#allocation3], %s184
          %s187 = ssub.s32 2048, 2048
          %188 = vsyncadd %s182, %s187
          %s189 = smul.addr %s17, 32
          %s190 = smul.addr %s189, 64
          %s191 = scalar_lea.hbm %s2, %s190
          %s192 = sshll.u32 %s185, 4
          %s193 = int_to_ptr.vmem [resolvable:$true] %s192
          %198 = dma.hbm_to_vmem [thread:$0]  %s191, 2048, %s193, %s182, 64, 64, 4
        $region32: #{tpu_custom_call.1} parent=23 // pred_fallthru
          _
      $region24: #{tpu_custom_call.1} parent=5 // pred_fallthru
        _
      %p199 = scmp.le.s32.totalorder 1, %s17
      %p200 = scmp.lt.s32.totalorder %s17, 4
      %p201 = pnand %p199, %p200
      %p202 = pneg %p201
      // Predicated region
      $region33: #{tpu_custom_call.1} parent=5 // pred_check
        _
      $region34: #{tpu_custom_call.1} parent=5 // pred_check_branch
        %204 = sbr.rel (%p201) target = $region36
      $region35: #{tpu_custom_call.1} parent=5 // pred_region
        %s205 = ssub.s32 %s17, 1
        %s206 = sand.u32 %s77, 1
        %s207 = scalar_lea.sflag [#allocation4], %s206
        %s208 = sand.u32 %s77, 1
        %s209 = smul.addr %s208, 128
        %s210 = scalar_lea.vmem [#allocation3], %s209
        // Predicated region
        $region37: #{tpu_custom_call.1} parent=35 // pred_check
          %p211 = pneg %p90
        $region38: #{tpu_custom_call.1} parent=35 // pred_check_branch
          %213 = sbr.rel (%p211) target = $region40
        $region39: #{tpu_custom_call.1} parent=35 // pred_region
          %214 = dma.done %s207, 2048
        $region40: #{tpu_custom_call.1} parent=35 // pred_fallthru
          _
        // Predicated region
        $region41: #{tpu_custom_call.1} parent=35 // pred_check
          %p215 = pneg %p111
        $region42: #{tpu_custom_call.1} parent=35 // pred_check_branch
          %217 = sbr.rel (%p215) target = $region44
        $region43: #{tpu_custom_call.1} parent=35 // pred_region
          %218 = dma.done [#allocation6], 16
        $region44: #{tpu_custom_call.1} parent=35 // pred_fallthru
          _
        %219 = sfence
        %p220 = pneg %p38
        %p221 = pneg %p35
        %p222 = scmp.lt.s32.totalorder %s22, 2
        %s223 = scalar_select %p222, %s22, 2
        %s224 = smul.addr %s223, 4
        %s225 = smul.addr %s224, 4
        %s226 = scalar_lea.vmem %s1, %s225
        %p227 = pneg %p64
        %p228 = pneg %p61
        %s229 = sand.u32 %s77, 1
        %s230 = scalar_lea.sflag [#allocation4], %s229
        %s231 = sand.u32 %s77, 1
        %s232 = smul.addr %s231, 128
        %s233 = scalar_lea.vmem [#allocation3], %s232
        %p234 = pneg %p90
        %p235 = pneg %p87
        %p236 = pneg %p111
        %p237 = pneg %p108
        %p238 = pneg %p137
        %p239 = pneg %p134
        %s240 = sand.u32 %s124, 1
        %s241 = scalar_lea.sflag [#allocation5], %s240
        %s242 = sand.u32 %s124, 1
        %s243 = smul.addr %s242, 64
        %s244 = scalar_lea.vmem [#allocation8], %s243
        %p245 = scmp.lt.s32.totalorder %s22, 2
        %s246 = scalar_select %p245, %s22, 2
        %s247 = smul.addr %s246, 4
        %s248 = smul.addr %s247, 4
        %s249 = scalar_lea.vmem %s1, %s248
        %s251 = smul.u32 %s22, 3
        %s252 = sld [smem:[#allocation7 + %s251]]
        %s253 = sadd.s32 %s251, 1
        %s254 = sld [smem:[#allocation7 + %s253]]
        %s255 = sadd.s32 %s251, 2
        %s256 = sld [smem:[#allocation7 + %s255]]
        %v257 = vld [vmem:[%s249] sm:$0xf]
        %v258 = vld [vmem:[%s249 + $0x4] sm:$0xf]
        %v259 = vld [vmem:[%s249 + $0x8] sm:$0xf]
        %v260 = vld [vmem:[%s249 + $0xc] sm:$0xf]
        %v261 = vld [vmem:[%s210] sm:$0xf]
        %v262 = vld [vmem:[%s210 + $0x4] sm:$0xf]
        %v263 = vld [vmem:[%s210 + $0x8] sm:$0xf]
        %v264 = vld [vmem:[%s210 + $0xc] sm:$0xf]
        %v265 = vld [vmem:[%s210 + $0x10] sm:$0xf]
        %v266 = vld [vmem:[%s210 + $0x14] sm:$0xf]
        %v267 = vld [vmem:[%s210 + $0x18] sm:$0xf]
        %v268 = vld [vmem:[%s210 + $0x1c] sm:$0xf]
        %v269 = vld [vmem:[%s210 + $0x20] sm:$0xf]
        %v270 = vld [vmem:[%s210 + $0x24] sm:$0xf]
        %v271 = vld [vmem:[%s210 + $0x28] sm:$0xf]
        %v272 = vld [vmem:[%s210 + $0x2c] sm:$0xf]
        %v273 = vld [vmem:[%s210 + $0x30] sm:$0xf]
        %v274 = vld [vmem:[%s210 + $0x34] sm:$0xf]
        %v275 = vld [vmem:[%s210 + $0x38] sm:$0xf]
        %v276 = vld [vmem:[%s210 + $0x3c] sm:$0xf]
        %v277 = vld [vmem:[%s210 + $0x40] sm:$0xf]
        %v278 = vld [vmem:[%s210 + $0x44] sm:$0xf]
        %v279 = vld [vmem:[%s210 + $0x48] sm:$0xf]
        %v280 = vld [vmem:[%s210 + $0x4c] sm:$0xf]
        %v281 = vld [vmem:[%s210 + $0x50] sm:$0xf]
        %v282 = vld [vmem:[%s210 + $0x54] sm:$0xf]
        %v283 = vld [vmem:[%s210 + $0x58] sm:$0xf]
        %v284 = vld [vmem:[%s210 + $0x5c] sm:$0xf]
        %v285 = vld [vmem:[%s210 + $0x60] sm:$0xf]
        %v286 = vld [vmem:[%s210 + $0x64] sm:$0xf]
        %v287 = vld [vmem:[%s210 + $0x68] sm:$0xf]
        %v288 = vld [vmem:[%s210 + $0x6c] sm:$0xf]
        %v289 = vld [vmem:[%s210 + $0x70] sm:$0xf]
        %v290 = vld [vmem:[%s210 + $0x74] sm:$0xf]
        %v291 = vld [vmem:[%s210 + $0x78] sm:$0xf]
        %v292 = vld [vmem:[%s210 + $0x7c] sm:$0xf]
        %v293 = vlaneseq
        %v294 = vand.u32 %v293, 127
        %vm295 = vcmask 130048
        %296 = vst.msk [vmem:[#allocation2] sm:$0xff] %vm295, 0.0
        loop: start=0, step=1, limit=8
        $region45: #{tpu_custom_call.1} parent=35 // loop_pre_header
          _
        $region46: #{tpu_custom_call.1} parent=35 // loop_header
          %s298 = sphi 0, %s302
          %p299 = scmp.ge.s32.totalorder %s298, 8
        $region47: #{tpu_custom_call.1} parent=35 // loop_header_branch
          %301 = sbr.rel (%p299) target = $region51
        $region48: #{tpu_custom_call.1} parent=35 // loop_body
          %s303 = smul.u32 %s298, 8
          %s304 = scalar_lea.vmem %s0, %s303
          %v305 = vld [vmem:[%s304] sm:$0xff]
          %306 = vset.pattern.permute.xlu0 0
          %307 = vperm.xlu0 %306, %v305
          %v308 = vpop.permute.xlu0 %307
          %vm309 = vcmp.eq.s32.totalorder %v308, %v294
          %v310 = vsel %vm309, 1, 0
          %v311 = vcvt.s32.f32 %v310
          %v312 = vpack.c.bf16 %v311, %v311
          %v317 = vunpack.c.l.b16 %v257
          %v318 = vunpack.c.l.b16 %v258
          %v319 = vunpack.c.l.b16 %v259
          %v320 = vunpack.c.l.b16 %v260
          %v321 = vpack.c.b16 %v318, %v317
          %v322 = vpack.c.b16 %v320, %v319
          %vm325 = vcmask 261120
          %v327 = vsel %vm325, %v312, 0
          %329 = vmatprep.subr.bf16.mxu0 0
          %330 = vmatpush1.bf16.msra.mxu0 %v321
          %331 = vmatprep.subr.bf16.mxu0 0
          %332 = vmatpush1.bf16.msra.mxu0 %v322
          %333 = vmatprep.subr.bf16.mxu0 0
          %334 = vmatpush1.bf16.msra.mxu0 0
          %335 = vmatprep.subr.bf16.mxu0 0
          %336 = vmatpush1.bf16.msra.mxu0 0
          %337 = vmatprep.subr.bf16.mxu0 0
          %338 = vmatpush1.bf16.msra.mxu0 0
          %339 = vmatprep.subr.bf16.mxu0 0
          %340 = vmatpush1.bf16.msra.mxu0 0
          %341 = vmatprep.subr.bf16.mxu0 0
          %342 = vmatpush1.bf16.msra.mxu0 0
          %343 = vmatprep.subr.bf16.mxu0 0
          %344 = vmatpush1.bf16.msra.mxu0 0
          %345 = vmatprep.subr.bf16.mxu0 0
          %346 = vmatpush1.bf16.msra.mxu0 0
          %347 = vmatprep.subr.bf16.mxu0 0
          %348 = vmatpush1.bf16.msra.mxu0 0
          %349 = vmatprep.subr.bf16.mxu0 0
          %350 = vmatpush1.bf16.msra.mxu0 0
          %351 = vmatprep.subr.bf16.mxu0 0
          %352 = vmatpush1.bf16.msra.mxu0 0
          %353 = vmatprep.subr.bf16.mxu0 0
          %354 = vmatpush1.bf16.msra.mxu0 0
          %355 = vmatprep.subr.bf16.mxu0 0
          %356 = vmatpush1.bf16.msra.mxu0 0
          %357 = vmatprep.subr.bf16.mxu0 0
          %358 = vmatpush1.bf16.msra.mxu0 0
          %359 = vmatprep.subr.bf16.mxu0 0
          %360 = vmatpush1.bf16.msra.mxu0 0
          %361 = vmatprep.mubr.bf16.mxu0 0
          %362 = vmatmul.mubr.bf16.gmra.mrb[0].mxu0 %v327
          %v363 = vpop.f32.mrb[0].mxu0
          %v364 = vadd.f32 0.0, %v363
          %v365 = vpop.f32.mrb[0].mxu0
          %v366 = vpop.f32.mrb[0].mxu0
          %v367 = vpop.f32.mrb[0].mxu0
          %368 = vdwg.mxu0
          %v369 = vmul.f32 %v364, %v364
          %v370 = vsel %vm295, %v369, 0.0
          %371 = vadd.xlane.f32.xlu0 %v370
          %v372 = vpop.xlane.xlu0 %371
          %v373 = vrsqrt.pop %v372
          %v374 = vmul.f32 %v372, %v373
          %vm375 = vcmp.eq.f32.partialorder %v372, inf
          %v376 = vsel %vm375, %v372, %v374
          %vm377 = vcmp.eq.f32.partialorder %v372, 0.0
          %v378 = vand.u32 %v372, 2147483648
          %v379 = vsel %vm377, %v378, %v376
          %v380 = vld [vmem:[#allocation2] sm:$0xff]
          %v381 = vmul.f32 %v380, %v380
          %v382 = vsel %vm295, %v381, 0.0
          %383 = vadd.xlane.f32.xlu0 %v382
          %v384 = vpop.xlane.xlu0 %383
          %v385 = vrsqrt.pop %v384
          %v386 = vmul.f32 %v384, %v385
          %vm387 = vcmp.eq.f32.partialorder %v384, inf
          %v388 = vsel %vm387, %v384, %v386
          %vm389 = vcmp.eq.f32.partialorder %v384, 0.0
          %v390 = vand.u32 %v384, 2147483648
          %v391 = vsel %vm389, %v390, %v388
          %v392 = vadd.f32 %v379, %v391
          %v393 = vrcp.pop %v392
          %v394 = vmul.f32 %v379, %v393
          %v395 = vstv %s254
          %v396 = vmul.f32 %v395, %v394
          %v397 = vstv %s256
          %v398 = vpow.f32 %v396, %v397
          %v399 = vstv %s252
          %v400 = vmul.f32 %v399, %v398
          %v401 = vmax.f32 %v400, 0.0
          %v402 = vmin.f32 %v401, 1.0
          %v403 = vsub.f32 1.0, %v402
          %v404 = vmul.f32 %v403, %v380
          %v405 = vmul.f32 %v402, %v364
          %v406 = vadd.f32 %v404, %v405
          %407 = vst.msk [vmem:[#allocation2] sm:$0xff] %vm295, %v406
          %v408 = vlaneseq
          %v409 = vshrl.u32 %v408, 7
          %v410 = vsub.s32 0, %v409
          %v411 = vrot.slane %v364, %v410
          %s413 = sor.u32 256, 16
          %414 = vbcast.lane.b32.xlu0 %v411, %s413
          %v415 = vpop.permute.xlu0 %414
          %s417 = sor.u32 256, 24
          %418 = vbcast.lane.b32.xlu0 %v411, %s417
          %v419 = vpop.permute.xlu0 %418
          %v420 = vlaneseq
          %v421 = vshrl.u32 %v420, 7
          %v422 = vsub.s32 1, %v421
          %v423 = vrot.slane %v364, %v422
          %s425 = sor.u32 256, 16
          %426 = vbcast.lane.b32.xlu0 %v423, %s425
          %v427 = vpop.permute.xlu0 %426
          %s429 = sor.u32 256, 24
          %430 = vbcast.lane.b32.xlu0 %v423, %s429
          %v431 = vpop.permute.xlu0 %430
          %v432 = vlaneseq
          %v433 = vshrl.u32 %v432, 7
          %v434 = vsub.s32 2, %v433
          %v435 = vrot.slane %v364, %v434
          %s437 = sor.u32 256, 16
          %438 = vbcast.lane.b32.xlu0 %v435, %s437
          %v439 = vpop.permute.xlu0 %438
          %s441 = sor.u32 256, 24
          %442 = vbcast.lane.b32.xlu0 %v435, %s441
          %v443 = vpop.permute.xlu0 %442
          %v444 = vlaneseq
          %v445 = vshrl.u32 %v444, 7
          %v446 = vsub.s32 3, %v445
          %v447 = vrot.slane %v364, %v446
          %s449 = sor.u32 256, 16
          %450 = vbcast.lane.b32.xlu0 %v447, %s449
          %v451 = vpop.permute.xlu0 %450
          %s453 = sor.u32 256, 24
          %454 = vbcast.lane.b32.xlu0 %v447, %s453
          %v455 = vpop.permute.xlu0 %454
          %v456 = vlaneseq
          %v457 = vshrl.u32 %v456, 7
          %v458 = vsub.s32 4, %v457
          %v459 = vrot.slane %v364, %v458
          %s461 = sor.u32 256, 16
          %462 = vbcast.lane.b32.xlu0 %v459, %s461
          %v463 = vpop.permute.xlu0 %462
          %s465 = sor.u32 256, 24
          %466 = vbcast.lane.b32.xlu0 %v459, %s465
          %v467 = vpop.permute.xlu0 %466
          %v468 = vlaneseq
          %v469 = vshrl.u32 %v468, 7
          %v470 = vsub.s32 5, %v469
          %v471 = vrot.slane %v364, %v470
          %s473 = sor.u32 256, 16
          %474 = vbcast.lane.b32.xlu0 %v471, %s473
          %v475 = vpop.permute.xlu0 %474
          %s477 = sor.u32 256, 24
          %478 = vbcast.lane.b32.xlu0 %v471, %s477
          %v479 = vpop.permute.xlu0 %478
          %v480 = vlaneseq
          %v481 = vshrl.u32 %v480, 7
          %v482 = vsub.s32 6, %v481
          %v483 = vrot.slane %v364, %v482
          %s485 = sor.u32 256, 16
          %486 = vbcast.lane.b32.xlu0 %v483, %s485
          %v487 = vpop.permute.xlu0 %486
          %s489 = sor.u32 256, 24
          %490 = vbcast.lane.b32.xlu0 %v483, %s489
          %v491 = vpop.permute.xlu0 %490
          %v492 = vlaneseq
          %v493 = vshrl.u32 %v492, 7
          %v494 = vsub.s32 7, %v493
          %v495 = vrot.slane %v364, %v494
          %s497 = sor.u32 256, 16
          %498 = vbcast.lane.b32.xlu0 %v495, %s497
          %v499 = vpop.permute.xlu0 %498
          %s501 = sor.u32 256, 24
          %502 = vbcast.lane.b32.xlu0 %v495, %s501
          %v503 = vpop.permute.xlu0 %502
          %v505 = vcombine.high %v406, %v406
          %v507 = vunpack.c.l.s4 1966171168
          %v508 = vunpack.c.0.s8 %v507
          %v509 = vlaneseq
          %v510 = vshrl.u32 %v509, 7
          %v511 = vsub.s32 %v508, %v510
          %v512 = vrot.slane %v406, %v511
          %v514 = vunpack.c.l.s4 1966171168
          %v515 = vunpack.c.0.s8 %v514
          %v516 = vlaneseq
          %v517 = vshrl.u32 %v516, 7
          %v518 = vsub.s32 %v515, %v517
          %v519 = vrot.slane %v505, %v518
          %v520 = vcombine.high %v512, %v512
          %v521 = vcombine.high %v519, %v519
          %v523 = vunpack.c.l.s4 1966171168
          %v524 = vunpack.c.0.s8 %v523
          %v525 = vlaneseq
          %v526 = vshrl.u32 %v525, 7
          %v527 = vsub.s32 %v524, %v526
          %v528 = vrot.slane %v512, %v527
          %v530 = vunpack.c.l.s4 1966171168
          %v531 = vunpack.c.0.s8 %v530
          %v532 = vlaneseq
          %v533 = vshrl.u32 %v532, 7
          %v534 = vsub.s32 %v531, %v533
          %v535 = vrot.slane %v519, %v534
          %v537 = vunpack.c.l.s4 1966171168
          %v538 = vunpack.c.0.s8 %v537
          %v539 = vlaneseq
          %v540 = vshrl.u32 %v539, 7
          %v541 = vsub.s32 %v538, %v540
          %v542 = vrot.slane %v520, %v541
          %v544 = vunpack.c.l.s4 1966171168
          %v545 = vunpack.c.0.s8 %v544
          %v546 = vlaneseq
          %v547 = vshrl.u32 %v546, 7
          %v548 = vsub.s32 %v545, %v547
          %v549 = vrot.slane %v521, %v548
          %v550 = vcombine.high %v528, %v528
          %v551 = vcombine.high %v535, %v535
          %v552 = vcombine.high %v542, %v542
          %v553 = vcombine.high %v549, %v549
          %v554 = vlaneseq
          %v555 = vshrl.u32 %v554, 7
          %v556 = vsub.s32 0, %v555
          %v557 = vrot.slane %v528, %v556
          %v558 = vlaneseq
          %v559 = vshrl.u32 %v558, 7
          %v560 = vsub.s32 0, %v559
          %v561 = vrot.slane %v542, %v560
          %v562 = vlaneseq
          %v563 = vshrl.u32 %v562, 7
          %v564 = vsub.s32 0, %v563
          %v565 = vrot.slane %v550, %v564
          %v566 = vlaneseq
          %v567 = vshrl.u32 %v566, 7
          %v568 = vsub.s32 0, %v567
          %v569 = vrot.slane %v552, %v568
          %v570 = vlaneseq
          %v571 = vshrl.u32 %v570, 7
          %v572 = vsub.s32 0, %v571
          %v573 = vrot.slane %v535, %v572
          %v574 = vlaneseq
          %v575 = vshrl.u32 %v574, 7
          %v576 = vsub.s32 0, %v575
          %v577 = vrot.slane %v549, %v576
          %v578 = vlaneseq
          %v579 = vshrl.u32 %v578, 7
          %v580 = vsub.s32 0, %v579
          %v581 = vrot.slane %v551, %v580
          %v582 = vlaneseq
          %v583 = vshrl.u32 %v582, 7
          %v584 = vsub.s32 0, %v583
          %v585 = vrot.slane %v553, %v584
          %v594 = vmul.f32 %v415, %v557
          %v595 = vmul.f32 %v419, %v557
          %v596 = vmul.f32 %v427, %v561
          %v597 = vmul.f32 %v431, %v561
          %v598 = vmul.f32 %v439, %v565
          %v599 = vmul.f32 %v443, %v565
          %v600 = vmul.f32 %v451, %v569
          %v601 = vmul.f32 %v455, %v569
          %v602 = vmul.f32 %v463, %v573
          %v603 = vmul.f32 %v467, %v573
          %v604 = vmul.f32 %v475, %v577
          %v605 = vmul.f32 %v479, %v577
          %v606 = vmul.f32 %v487, %v581
          %v607 = vmul.f32 %v491, %v581
          %v608 = vmul.f32 %v499, %v585
          %v609 = vmul.f32 %v503, %v585
          %v610 = vcombine.low %v594, %v598
          %v611 = vcombine.high %v594, %v598
          %v613 = vunpack.c.l.s4 1983009808
          %v614 = vunpack.c.0.s8 %v613
          %v615 = vlaneseq
          %v616 = vshrl.u32 %v615, 7
          %v617 = vsub.s32 %v614, %v616
          %v618 = vrot.slane %v610, %v617
          %v620 = vunpack.c.l.s4 1983009808
          %v621 = vunpack.c.0.s8 %v620
          %v622 = vlaneseq
          %v623 = vshrl.u32 %v622, 7
          %v624 = vsub.s32 %v621, %v623
          %v625 = vrot.slane %v611, %v624
          %v626 = vcombine.low %v596, %v600
          %v627 = vcombine.high %v596, %v600
          %v629 = vunpack.c.l.s4 1983009808
          %v630 = vunpack.c.0.s8 %v629
          %v631 = vlaneseq
          %v632 = vshrl.u32 %v631, 7
          %v633 = vsub.s32 %v630, %v632
          %v634 = vrot.slane %v626, %v633
          %v636 = vunpack.c.l.s4 1983009808
          %v637 = vunpack.c.0.s8 %v636
          %v638 = vlaneseq
          %v639 = vshrl.u32 %v638, 7
          %v640 = vsub.s32 %v637, %v639
          %v641 = vrot.slane %v627, %v640
          %v642 = vcombine.low %v602, %v606
          %v643 = vcombine.high %v602, %v606
          %v645 = vunpack.c.l.s4 1983009808
          %v646 = vunpack.c.0.s8 %v645
          %v647 = vlaneseq
          %v648 = vshrl.u32 %v647, 7
          %v649 = vsub.s32 %v646, %v648
          %v650 = vrot.slane %v642, %v649
          %v652 = vunpack.c.l.s4 1983009808
          %v653 = vunpack.c.0.s8 %v652
          %v654 = vlaneseq
          %v655 = vshrl.u32 %v654, 7
          %v656 = vsub.s32 %v653, %v655
          %v657 = vrot.slane %v643, %v656
          %v658 = vcombine.low %v604, %v608
          %v659 = vcombine.high %v604, %v608
          %v661 = vunpack.c.l.s4 1983009808
          %v662 = vunpack.c.0.s8 %v661
          %v663 = vlaneseq
          %v664 = vshrl.u32 %v663, 7
          %v665 = vsub.s32 %v662, %v664
          %v666 = vrot.slane %v658, %v665
          %v668 = vunpack.c.l.s4 1983009808
          %v669 = vunpack.c.0.s8 %v668
          %v670 = vlaneseq
          %v671 = vshrl.u32 %v670, 7
          %v672 = vsub.s32 %v669, %v671
          %v673 = vrot.slane %v659, %v672
          %v674 = vcombine.low %v618, %v634
          %v675 = vcombine.high %v618, %v634
          %v677 = vunpack.c.l.s4 1934713408
          %v678 = vunpack.c.0.s8 %v677
          %v679 = vlaneseq
          %v680 = vshrl.u32 %v679, 7
          %v681 = vsub.s32 %v678, %v680
          %v682 = vrot.slane %v674, %v681
          %v684 = vunpack.c.l.s4 1934713408
          %v685 = vunpack.c.0.s8 %v684
          %v686 = vlaneseq
          %v687 = vshrl.u32 %v686, 7
          %v688 = vsub.s32 %v685, %v687
          %v689 = vrot.slane %v675, %v688
          %v690 = vcombine.low %v625, %v641
          %v691 = vcombine.high %v625, %v641
          %v693 = vunpack.c.l.s4 1934713408
          %v694 = vunpack.c.0.s8 %v693
          %v695 = vlaneseq
          %v696 = vshrl.u32 %v695, 7
          %v697 = vsub.s32 %v694, %v696
          %v698 = vrot.slane %v690, %v697
          %v700 = vunpack.c.l.s4 1934713408
          %v701 = vunpack.c.0.s8 %v700
          %v702 = vlaneseq
          %v703 = vshrl.u32 %v702, 7
          %v704 = vsub.s32 %v701, %v703
          %v705 = vrot.slane %v691, %v704
          %v706 = vcombine.low %v650, %v666
          %v707 = vcombine.high %v650, %v666
          %v709 = vunpack.c.l.s4 1934713408
          %v710 = vunpack.c.0.s8 %v709
          %v711 = vlaneseq
          %v712 = vshrl.u32 %v711, 7
          %v713 = vsub.s32 %v710, %v712
          %v714 = vrot.slane %v706, %v713
          %v716 = vunpack.c.l.s4 1934713408
          %v717 = vunpack.c.0.s8 %v716
          %v718 = vlaneseq
          %v719 = vshrl.u32 %v718, 7
          %v720 = vsub.s32 %v717, %v719
          %v721 = vrot.slane %v707, %v720
          %v722 = vcombine.low %v657, %v673
          %v723 = vcombine.high %v657, %v673
          %v725 = vunpack.c.l.s4 1934713408
          %v726 = vunpack.c.0.s8 %v725
          %v727 = vlaneseq
          %v728 = vshrl.u32 %v727, 7
          %v729 = vsub.s32 %v726, %v728
          %v730 = vrot.slane %v722, %v729
          %v732 = vunpack.c.l.s4 1934713408
          %v733 = vunpack.c.0.s8 %v732
          %v734 = vlaneseq
          %v735 = vshrl.u32 %v734, 7
          %v736 = vsub.s32 %v733, %v735
          %v737 = vrot.slane %v723, %v736
          %v738 = vcombine.low %v682, %v714
          %v739 = vcombine.high %v682, %v714
          %v740 = vcombine.low %v689, %v721
          %v741 = vcombine.high %v689, %v721
          %v742 = vcombine.low %v698, %v730
          %v743 = vcombine.high %v698, %v730
          %v744 = vcombine.low %v705, %v737
          %v745 = vcombine.high %v705, %v737
          %v746 = vcombine.low %v595, %v599
          %v747 = vcombine.high %v595, %v599
          %v749 = vunpack.c.l.s4 1983009808
          %v750 = vunpack.c.0.s8 %v749
          %v751 = vlaneseq
          %v752 = vshrl.u32 %v751, 7
          %v753 = vsub.s32 %v750, %v752
          %v754 = vrot.slane %v746, %v753
          %v756 = vunpack.c.l.s4 1983009808
          %v757 = vunpack.c.0.s8 %v756
          %v758 = vlaneseq
          %v759 = vshrl.u32 %v758, 7
          %v760 = vsub.s32 %v757, %v759
          %v761 = vrot.slane %v747, %v760
          %v762 = vcombine.low %v597, %v601
          %v763 = vcombine.high %v597, %v601
          %v765 = vunpack.c.l.s4 1983009808
          %v766 = vunpack.c.0.s8 %v765
          %v767 = vlaneseq
          %v768 = vshrl.u32 %v767, 7
          %v769 = vsub.s32 %v766, %v768
          %v770 = vrot.slane %v762, %v769
          %v772 = vunpack.c.l.s4 1983009808
          %v773 = vunpack.c.0.s8 %v772
          %v774 = vlaneseq
          %v775 = vshrl.u32 %v774, 7
          %v776 = vsub.s32 %v773, %v775
          %v777 = vrot.slane %v763, %v776
          %v778 = vcombine.low %v603, %v607
          %v779 = vcombine.high %v603, %v607
          %v781 = vunpack.c.l.s4 1983009808
          %v782 = vunpack.c.0.s8 %v781
          %v783 = vlaneseq
          %v784 = vshrl.u32 %v783, 7
          %v785 = vsub.s32 %v782, %v784
          %v786 = vrot.slane %v778, %v785
          %v788 = vunpack.c.l.s4 1983009808
          %v789 = vunpack.c.0.s8 %v788
          %v790 = vlaneseq
          %v791 = vshrl.u32 %v790, 7
          %v792 = vsub.s32 %v789, %v791
          %v793 = vrot.slane %v779, %v792
          %v794 = vcombine.low %v605, %v609
          %v795 = vcombine.high %v605, %v609
          %v797 = vunpack.c.l.s4 1983009808
          %v798 = vunpack.c.0.s8 %v797
          %v799 = vlaneseq
          %v800 = vshrl.u32 %v799, 7
          %v801 = vsub.s32 %v798, %v800
          %v802 = vrot.slane %v794, %v801
          %v804 = vunpack.c.l.s4 1983009808
          %v805 = vunpack.c.0.s8 %v804
          %v806 = vlaneseq
          %v807 = vshrl.u32 %v806, 7
          %v808 = vsub.s32 %v805, %v807
          %v809 = vrot.slane %v795, %v808
          %v810 = vcombine.low %v754, %v770
          %v811 = vcombine.high %v754, %v770
          %v813 = vunpack.c.l.s4 1934713408
          %v814 = vunpack.c.0.s8 %v813
          %v815 = vlaneseq
          %v816 = vshrl.u32 %v815, 7
          %v817 = vsub.s32 %v814, %v816
          %v818 = vrot.slane %v810, %v817
          %v820 = vunpack.c.l.s4 1934713408
          %v821 = vunpack.c.0.s8 %v820
          %v822 = vlaneseq
          %v823 = vshrl.u32 %v822, 7
          %v824 = vsub.s32 %v821, %v823
          %v825 = vrot.slane %v811, %v824
          %v826 = vcombine.low %v761, %v777
          %v827 = vcombine.high %v761, %v777
          %v829 = vunpack.c.l.s4 1934713408
          %v830 = vunpack.c.0.s8 %v829
          %v831 = vlaneseq
          %v832 = vshrl.u32 %v831, 7
          %v833 = vsub.s32 %v830, %v832
          %v834 = vrot.slane %v826, %v833
          %v836 = vunpack.c.l.s4 1934713408
          %v837 = vunpack.c.0.s8 %v836
          %v838 = vlaneseq
          %v839 = vshrl.u32 %v838, 7
          %v840 = vsub.s32 %v837, %v839
          %v841 = vrot.slane %v827, %v840
          %v842 = vcombine.low %v786, %v802
          %v843 = vcombine.high %v786, %v802
          %v845 = vunpack.c.l.s4 1934713408
          %v846 = vunpack.c.0.s8 %v845
          %v847 = vlaneseq
          %v848 = vshrl.u32 %v847, 7
          %v849 = vsub.s32 %v846, %v848
          %v850 = vrot.slane %v842, %v849
          %v852 = vunpack.c.l.s4 1934713408
          %v853 = vunpack.c.0.s8 %v852
          %v854 = vlaneseq
          %v855 = vshrl.u32 %v854, 7
          %v856 = vsub.s32 %v853, %v855
          %v857 = vrot.slane %v843, %v856
          %v858 = vcombine.low %v793, %v809
          %v859 = vcombine.high %v793, %v809
          %v861 = vunpack.c.l.s4 1934713408
          %v862 = vunpack.c.0.s8 %v861
          %v863 = vlaneseq
          %v864 = vshrl.u32 %v863, 7
          %v865 = vsub.s32 %v862, %v864
          %v866 = vrot.slane %v858, %v865
          %v868 = vunpack.c.l.s4 1934713408
          %v869 = vunpack.c.0.s8 %v868
          %v870 = vlaneseq
          %v871 = vshrl.u32 %v870, 7
          %v872 = vsub.s32 %v869, %v871
          %v873 = vrot.slane %v859, %v872
          %v874 = vcombine.low %v818, %v850
          %v875 = vcombine.high %v818, %v850
          %v876 = vcombine.low %v825, %v857
          %v877 = vcombine.high %v825, %v857
          %v878 = vcombine.low %v834, %v866
          %v879 = vcombine.high %v834, %v866
          %v880 = vcombine.low %v841, %v873
          %v881 = vcombine.high %v841, %v873
          %883 = vrot.lane.b32.xlu0 %v739, 16
          %v884 = vpop.permute.xlu0 %883
          %887 = vrot.lane.b32.xlu0 %v740, 32
          %v888 = vpop.permute.xlu0 %887
          %891 = vrot.lane.b32.xlu0 %v741, 48
          %v892 = vpop.permute.xlu0 %891
          %895 = vrot.lane.b32.xlu0 %v742, 64
          %v896 = vpop.permute.xlu0 %895
          %899 = vrot.lane.b32.xlu0 %v743, 80
          %v900 = vpop.permute.xlu0 %899
          %903 = vrot.lane.b32.xlu0 %v744, 96
          %v904 = vpop.permute.xlu0 %903
          %907 = vrot.lane.b32.xlu0 %v745, 112
          %v908 = vpop.permute.xlu0 %907
          %911 = vrot.lane.b32.xlu0 %v875, 16
          %v912 = vpop.permute.xlu0 %911
          %915 = vrot.lane.b32.xlu0 %v876, 32
          %v916 = vpop.permute.xlu0 %915
          %919 = vrot.lane.b32.xlu0 %v877, 48
          %v920 = vpop.permute.xlu0 %919
          %923 = vrot.lane.b32.xlu0 %v878, 64
          %v924 = vpop.permute.xlu0 %923
          %927 = vrot.lane.b32.xlu0 %v879, 80
          %v928 = vpop.permute.xlu0 %927
          %931 = vrot.lane.b32.xlu0 %v880, 96
          %v932 = vpop.permute.xlu0 %931
          %935 = vrot.lane.b32.xlu0 %v881, 112
          %v936 = vpop.permute.xlu0 %935
          %v938 = vsel %vm295, %v738, %v884
          %v939 = vsel %vm325, %v938, %v888
          %vm940 = vcmask 392192
          %v941 = vsel %vm940, %v939, %v892
          %vm942 = vcmask 523264
          %v943 = vsel %vm942, %v941, %v896
          %vm944 = vcmask 654336
          %v945 = vsel %vm944, %v943, %v900
          %vm946 = vcmask 785408
          %v947 = vsel %vm946, %v945, %v904
          %vm948 = vcmask 916480
          %v949 = vsel %vm948, %v947, %v908
          %v950 = vsel %vm295, %v874, %v912
          %v951 = vsel %vm325, %v950, %v916
          %v952 = vsel %vm940, %v951, %v920
          %v953 = vsel %vm942, %v952, %v924
          %v954 = vsel %vm944, %v953, %v928
          %v955 = vsel %vm946, %v954, %v932
          %v956 = vsel %vm948, %v955, %v936
          %v957 = vpack.c.bf16 %v949, %v949
          %v958 = vpack.c.bf16 %v956, %v956
          %v991 = vunpack.c.l.b16 %v261
          %v992 = vunpack.c.l.b16 %v262
          %v993 = vunpack.c.l.b16 %v263
          %v994 = vunpack.c.l.b16 %v264
          %v995 = vunpack.c.l.b16 %v265
          %v996 = vunpack.c.l.b16 %v266
          %v997 = vunpack.c.l.b16 %v267
          %v998 = vunpack.c.l.b16 %v268
          %v999 = vunpack.c.l.b16 %v269
          %v1000 = vunpack.c.l.b16 %v270
          %v1001 = vunpack.c.l.b16 %v271
          %v1002 = vunpack.c.l.b16 %v272
          %v1003 = vunpack.c.l.b16 %v273
          %v1004 = vunpack.c.l.b16 %v274
          %v1005 = vunpack.c.l.b16 %v275
          %v1006 = vunpack.c.l.b16 %v276
          %v1007 = vunpack.c.l.b16 %v277
          %v1008 = vunpack.c.l.b16 %v278
          %v1009 = vunpack.c.l.b16 %v279
          %v1010 = vunpack.c.l.b16 %v280
          %v1011 = vunpack.c.l.b16 %v281
          %v1012 = vunpack.c.l.b16 %v282
          %v1013 = vunpack.c.l.b16 %v283
          %v1014 = vunpack.c.l.b16 %v284
          %v1015 = vunpack.c.l.b16 %v285
          %v1016 = vunpack.c.l.b16 %v286
          %v1017 = vunpack.c.l.b16 %v287
          %v1018 = vunpack.c.l.b16 %v288
          %v1019 = vunpack.c.l.b16 %v289
          %v1020 = vunpack.c.l.b16 %v290
          %v1021 = vunpack.c.l.b16 %v291
          %v1022 = vunpack.c.l.b16 %v292
          %v1023 = vpack.c.b16 %v992, %v991
          %v1024 = vpack.c.b16 %v994, %v993
          %v1025 = vpack.c.b16 %v996, %v995
          %v1026 = vpack.c.b16 %v998, %v997
          %v1027 = vpack.c.b16 %v1000, %v999
          %v1028 = vpack.c.b16 %v1002, %v1001
          %v1029 = vpack.c.b16 %v1004, %v1003
          %v1030 = vpack.c.b16 %v1006, %v1005
          %v1031 = vpack.c.b16 %v1008, %v1007
          %v1032 = vpack.c.b16 %v1010, %v1009
          %v1033 = vpack.c.b16 %v1012, %v1011
          %v1034 = vpack.c.b16 %v1014, %v1013
          %v1035 = vpack.c.b16 %v1016, %v1015
          %v1036 = vpack.c.b16 %v1018, %v1017
          %v1037 = vpack.c.b16 %v1020, %v1019
          %v1038 = vpack.c.b16 %v1022, %v1021
          %1055 = vmatprep.subr.bf16.mxu0 0
          %1056 = vmatpush1.bf16.msra.mxu0 %v1023
          %1057 = vmatprep.subr.bf16.mxu0 0
          %1058 = vmatpush1.bf16.msra.mxu0 %v1024
          %1059 = vmatprep.subr.bf16.mxu0 0
          %1060 = vmatpush1.bf16.msra.mxu0 %v1025
          %1061 = vmatprep.subr.bf16.mxu0 0
          %1062 = vmatpush1.bf16.msra.mxu0 %v1026
          %1063 = vmatprep.subr.bf16.mxu0 0
          %1064 = vmatpush1.bf16.msra.mxu0 %v1027
          %1065 = vmatprep.subr.bf16.mxu0 0
          %1066 = vmatpush1.bf16.msra.mxu0 %v1028
          %1067 = vmatprep.subr.bf16.mxu0 0
          %1068 = vmatpush1.bf16.msra.mxu0 %v1029
          %1069 = vmatprep.subr.bf16.mxu0 0
          %1070 = vmatpush1.bf16.msra.mxu0 %v1030
          %1071 = vmatprep.subr.bf16.mxu0 0
          %1072 = vmatpush1.bf16.msra.mxu0 %v1031
          %1073 = vmatprep.subr.bf16.mxu0 0
          %1074 = vmatpush1.bf16.msra.mxu0 %v1032
          %1075 = vmatprep.subr.bf16.mxu0 0
          %1076 = vmatpush1.bf16.msra.mxu0 %v1033
          %1077 = vmatprep.subr.bf16.mxu0 0
          %1078 = vmatpush1.bf16.msra.mxu0 %v1034
          %1079 = vmatprep.subr.bf16.mxu0 0
          %1080 = vmatpush1.bf16.msra.mxu0 %v1035
          %1081 = vmatprep.subr.bf16.mxu0 0
          %1082 = vmatpush1.bf16.msra.mxu0 %v1036
          %1083 = vmatprep.subr.bf16.mxu0 0
          %1084 = vmatpush1.bf16.msra.mxu0 %v1037
          %1085 = vmatprep.subr.bf16.mxu0 0
          %1086 = vmatpush1.bf16.msra.mxu0 %v1038
          %1087 = vmatprep.mubr.bf16.mxu0 %v958
          %1088 = vmatmul.mubr.bf16.gmra.mrb[0].mxu0 %v957
          %v1089 = vpop.f32.mrb[0].mxu0
          %v1090 = vadd.f32 0.0, %v1089
          %v1091 = vpop.f32.mrb[0].mxu0
          %v1092 = vpop.f32.mrb[0].mxu0
          %v1093 = vpop.f32.mrb[0].mxu0
          %1094 = vdwg.mxu0
          %s1095 = scalar_lea.vmem %s244, %s303 [#allocation8]
          %1096 = vst [vmem:[%s1095] sm:$0xff] %v1090
        $region49: #{tpu_custom_call.1} parent=35 // loop_footer
          %s302 = sadd.s32 1, %s298
        $region50: #{tpu_custom_call.1} parent=35 // loop_footer_branch
          %297 = sbr.rel target = $region46
        $region51: #{tpu_custom_call.1} parent=35 // loop_exit
          _
        %s1097 = sand.u32 %s124, 1
        %s1098 = scalar_lea.sflag [#allocation5], %s1097
        %s1099 = sand.u32 %s124, 1
        %s1100 = smul.addr %s1099, 64
        %s1101 = scalar_lea.vmem [#allocation8], %s1100
        // Predicated region
        $region52: #{tpu_custom_call.1} parent=35 // pred_check
          %p1102 = pneg %p134
        $region53: #{tpu_custom_call.1} parent=35 // pred_check_branch
          %1104 = sbr.rel (%p1102) target = $region55
        $region54: #{tpu_custom_call.1} parent=35 // pred_region
          %s1106 = ssub.s32 1024, 1024
          %1107 = vsyncadd %s1098, %s1106
          %s1108 = smul.addr %s22, 8
          %s1109 = smul.addr %s1108, 128
          %s1110 = scalar_lea.hbm %s4, %s1109
          %s1111 = sshll.u32 %s1101, 4
          %s1112 = int_to_ptr.vmem [resolvable:$true] %s1111
          %1117 = dma.vmem_to_hbm [thread:$0]  %s1112, 1024, %s1110, %s1098, 128, 128, 8
        $region55: #{tpu_custom_call.1} parent=35 // pred_fallthru
          _
      $region36: #{tpu_custom_call.1} parent=5 // pred_fallthru
        _
      %p1118 = scmp.le.s32.totalorder 2, %s17
      // Predicated region
      $region56: #{tpu_custom_call.1} parent=5 // pred_check
        %p1119 = pneg %p1118
      $region57: #{tpu_custom_call.1} parent=5 // pred_check_branch
        %1121 = sbr.rel (%p1119) target = $region59
      $region58: #{tpu_custom_call.1} parent=5 // pred_region
        %s1122 = ssub.s32 %s17, 2
        // Predicated region
        $region60: #{tpu_custom_call.1} parent=58 // pred_check
          %p1123 = pneg %p140
        $region61: #{tpu_custom_call.1} parent=58 // pred_check_branch
          %1125 = sbr.rel (%p1123) target = $region63
        $region62: #{tpu_custom_call.1} parent=58 // pred_region
          %s1126 = sand.u32 %s125, 1
          %s1127 = scalar_lea.sflag [#allocation5], %s1126
          %s1128 = sand.u32 %s125, 1
          %s1129 = smul.addr %s1128, 64
          %s1130 = scalar_lea.vmem [#allocation8], %s1129
          %1131 = dma.done %s1127, 1024
        $region63: #{tpu_custom_call.1} parent=58 // pred_fallthru
          _
      $region59: #{tpu_custom_call.1} parent=5 // pred_fallthru
        _
    $region6: #{tpu_custom_call.1} parent=1 // loop_footer
      %s21 = sadd.s32 1, %s17
    $region7: #{tpu_custom_call.1} parent=1 // loop_footer_branch
      %16 = sbr.rel target = $region3
    $region8: #{tpu_custom_call.1} parent=1 // loop_exit
      _
    %1132 = vsyncpa [#allocation4], 1
    %s1133 = scalar_lea.sflag [#allocation4], 1
    %1134 = vsyncpa %s1133, 1
    %1135 = vsyncpa [#allocation5], 1
    %s1136 = scalar_lea.sflag [#allocation5], 1
    %1137 = vsyncpa %s1136, 1
    %1138 = vsyncpa [#allocation6], 1
    %s1139 = scalar_lea.sflag [#allocation6], 1
    %1140 = vsyncpa %s1139, 1

</llo_original>
